<compile_context>
chip_gen: v7x
topology: tpu7x:2x2x1
jax: 0.10.0
libtpu: 0.0.40
codegen_flags: <defaults>
</compile_context>

<pallas_src>
import functools

import jax
import jax.numpy as jnp
import numpy as np
from jax.experimental import pallas as pl
from jax.experimental.pallas import tpu as pltpu

SMOOTH = 1e-5


def _dice_partial_kernel(score_ref, target_ref, out_ref, *,
                         hw, tile_hw, apply_softmax):
    """Accumulates per-class (intersect, z_sum, y_sum) for one batch element.

    score_ref / target_ref : (C, tile_hw) block of the (B, C, HW) tensors.
    out_ref                : (C, 3) per-batch accumulator, resident across
                             the HW-tile grid axis.
    """
    j = pl.program_id(1)

    @pl.when(j == 0)
    def _init():
        out_ref[...] = jnp.zeros_like(out_ref)

    s = score_ref[...].astype(jnp.float32)   # (C, tile_hw)
    t = target_ref[...].astype(jnp.float32)  # (C, tile_hw)

    ragged = (hw % tile_hw) != 0
    if ragged:
        col = jax.lax.broadcasted_iota(jnp.int32, s.shape, dimension=1)
        valid = (j * tile_hw + col) < hw
        s = jnp.where(valid, s, 0.0)
        t = jnp.where(valid, t, 0.0)

    if apply_softmax:
        # Softmax over the class axis (sublanes); max-subtraction for
        # numerical parity with jax.nn.softmax / torch.softmax.
        m = jnp.max(s, axis=0, keepdims=True)            # (1, tile_hw)  XLU
        e = jnp.exp(s - m)                               # EUP
        s = e * pl.reciprocal(jnp.sum(e, axis=0, keepdims=True))
        if ragged:
            # Padded columns would otherwise contribute 1/C to z_sum.
            s = jnp.where(valid, s, 0.0)

    intersect = jnp.sum(s * t, axis=1, keepdims=True)    # (C, 1)
    z_sum = jnp.sum(s * s, axis=1, keepdims=True)        # (C, 1)
    y_sum = jnp.sum(t * t, axis=1, keepdims=True)        # (C, 1)
    out_ref[...] += jnp.concatenate([intersect, z_sum, y_sum], axis=1)


def _select_tile(hw, c, itemsize, tile_hw):
    """Pick the HW-axis tile: multiple of 128 sized from a VMEM budget."""
    if tile_hw is not None:
        if tile_hw >= hw:
            return hw
        return max(128, (tile_hw // 128) * 128)
    # ~8 MiB for the double-buffered input blocks (2 inputs x 2 buffers x C).
    budget = 8 * 1024 * 1024
    per_col = 2 * 2 * c * itemsize
    tile = (budget // per_col // 128) * 128
    tile = max(512, min(tile, 1 << 15))
    if tile >= hw:
        return hw
    return tile


@functools.partial(jax.jit, static_argnames=("softmax", "tile_hw"))
def dice_loss(inputs, target, weight=None, softmax=False, tile_hw=None):
    """Matches DiceLoss.forward(inputs, target, weight, softmax).

    `inputs` / `target` are NCHW with identical shapes (target already
    one-hot, as the PyTorch forward asserts).
    """
    B, C, H, W = inputs.shape
    assert inputs.shape == target.shape, "predict & target shape do not match"
    HW = H * W

    # Free, contiguous reshapes — no transpose, no pad, no dtype upcast.
    score = inputs.reshape(B, C, HW)
    tgt = target.reshape(B, C, HW)

    itemsize = max(jnp.dtype(inputs.dtype).itemsize,
                   jnp.dtype(target.dtype).itemsize)
    tile = _select_tile(HW, C, itemsize, tile_hw)
    n_hw_tiles = pl.cdiv(HW, tile)

    kernel = functools.partial(
        _dice_partial_kernel, hw=HW, tile_hw=tile, apply_softmax=softmax)

    bytes_accessed = (score.size * jnp.dtype(score.dtype).itemsize
                      + tgt.size * jnp.dtype(tgt.dtype).itemsize
                      + B * C * 3 * 4)
    cost = pl.CostEstimate(
        flops=8 * B * C * HW,
        transcendentals=(B * C * HW if softmax else 0),
        bytes_accessed=bytes_accessed)

    # Per-batch, per-class partial sums: [...,0]=intersect, [1]=z_sum, [2]=y_sum
    partial_sums = pl.pallas_call(
        kernel,
        grid=(B, n_hw_tiles),
        in_specs=[
            pl.BlockSpec((None, C, tile), lambda b, j: (b, 0, j)),
            pl.BlockSpec((None, C, tile), lambda b, j: (b, 0, j)),
        ],
        out_specs=pl.BlockSpec((None, C, 3), lambda b, j: (b, 0, 0)),
        out_shape=jax.ShapeDtypeStruct((B, C, 3), jnp.float32),
        compiler_params=pltpu.CompilerParams(
            dimension_semantics=("parallel", "arbitrary")),
        cost_estimate=cost,
    )(score, tgt)

    # Tiny glue: combine batches, compute per-class dice, weight, mean.
    if weight is None:
        weight = jnp.ones((C,), jnp.float32)
    else:
        weight = jnp.asarray(weight, jnp.float32)

    sums = jnp.sum(partial_sums, axis=0)                  # (C, 3)
    intersect, z_sum, y_sum = sums[:, 0], sums[:, 1], sums[:, 2]
    dice = 1.0 - (2.0 * intersect + SMOOTH) / (z_sum + y_sum + SMOOTH)
    return jnp.sum(dice * weight) / C


def _dice_loss_ref(inputs, target, weight=None, softmax=False):
    """Pure-JAX reference mirroring the PyTorch module."""
    if softmax:
        inputs = jax.nn.softmax(inputs, axis=1)
    C = inputs.shape[1]
    if weight is None:
        weight = [1.0] * C
    loss = 0.0
    for i in range(C):
        s = inputs[:, i].astype(jnp.float32)
        t = target[:, i].astype(jnp.float32)
        intersect = jnp.sum(s * t)
        y_sum = jnp.sum(t * t)
        z_sum = jnp.sum(s * s)
        dice = 1.0 - (2.0 * intersect + SMOOTH) / (z_sum + y_sum + SMOOTH)
        loss = loss + dice * weight[i]
    return loss / C


if __name__ == "__main__":
    key = jax.random.PRNGKey(0)

    # --- Test 1: B=2, C=4, H=W=16, softmax fused in-kernel, uniform weights.
    B, C, H, W = 2, 4, 16, 16
    k1, k2, k3 = jax.random.split(key, 3)
    logits = jax.random.normal(k1, (B, C, H, W), dtype=jnp.float32)
    labels = jax.random.randint(k2, (B, H, W), 0, C)
    target = jnp.transpose(
        jax.nn.one_hot(labels, C, dtype=jnp.float32), (0, 3, 1, 2))

    loss = jax.block_until_ready(dice_loss(logits, target, softmax=True))
    ref = jax.block_until_ready(_dice_loss_ref(logits, target, softmax=True))
    np.testing.assert_allclose(np.asarray(loss), np.asarray(ref),
                               rtol=1e-5, atol=1e-6)

    # --- Test 2: ragged spatial extent (18*18 = 324), explicit class weights,
    #             tiny tile to exercise the in-kernel tail mask + accumulator.
    H2 = W2 = 18
    k4, k5, k6 = jax.random.split(k3, 3)
    logits2 = jax.random.normal(k4, (B, C, H2, W2), dtype=jnp.float32)
    labels2 = jax.random.randint(k5, (B, H2, W2), 0, C)
    target2 = jnp.transpose(
        jax.nn.one_hot(labels2, C, dtype=jnp.float32), (0, 3, 1, 2))
    wts = jnp.array([0.5, 1.0, 1.5, 2.0], jnp.float32)

    loss2 = jax.block_until_ready(
        dice_loss(logits2, target2, weight=wts, softmax=True, tile_hw=128))
    ref2 = jax.block_until_ready(
        _dice_loss_ref(logits2, target2, weight=wts, softmax=True))
    np.testing.assert_allclose(np.asarray(loss2), np.asarray(ref2),
                               rtol=1e-5, atol=1e-6)

    # --- Test 3: softmax=False path (probabilities passed directly),
    #             multi-tile grid accumulation (H=W=32, tile=512 -> 2 tiles).
    H3 = W3 = 32
    k7, k8 = jax.random.split(k6)
    probs3 = jax.nn.softmax(
        jax.random.normal(k7, (B, C, H3, W3), dtype=jnp.float32), axis=1)
    labels3 = jax.random.randint(k8, (B, H3, W3), 0, C)
    target3 = jnp.transpose(
        jax.nn.one_hot(labels3, C, dtype=jnp.float32), (0, 3, 1, 2))

    loss3 = jax.block_until_ready(
        dice_loss(probs3, target3, softmax=False, tile_hw=512))
    ref3 = jax.block_until_ready(
        _dice_loss_ref(probs3, target3, softmax=False))
    np.testing.assert_allclose(np.asarray(loss3), np.asarray(ref3),
                               rtol=1e-5, atol=1e-6)

    print("KERNEL_OK")
</pallas_src>

<mosaic_0001>
module attributes {stable_mosaic.version = 11 : i64} {
  func.func @_dice_partial_kernel(%arg0: i32, %arg1: i32, %arg2: memref<1x4x256xf32, #tpu.memory_space<vmem>>, %arg3: memref<1x4x256xf32, #tpu.memory_space<vmem>>, %arg4: memref<1x4x3xf32, #tpu.memory_space<vmem>>) attributes {dimension_semantics = [#tpu.dimension_semantics<parallel>, #tpu.dimension_semantics<arbitrary>], iteration_bounds = array<i64: 2, 1>, scalar_prefetch = 0 : i64, scratch_operands = 0 : i64, tpu.core_type = #tpu.core_type<tc>, window_params = [{transform_indices = @transform_0, window_bounds = array<i64: 1, 4, 256>}, {transform_indices = @transform_1, window_bounds = array<i64: 1, 4, 256>}, {transform_indices = @transform_2, window_bounds = array<i64: 1, 4, 3>}]} {
    %c0_i32 = arith.constant 0 : i32
    %0 = arith.cmpi eq, %arg1, %c0_i32 : i32
    %1 = arith.extui %0 : i1 to i32
    %c0_i32_0 = arith.constant 0 : i32
    %2 = arith.cmpi ne, %1, %c0_i32_0 : i32
    scf.if %2 {
      %cst_16 = arith.constant 0.000000e+00 : f32
      %33 = vector.broadcast %cst_16 : f32 to vector<4x3xf32>
      %c0_17 = arith.constant 0 : index
      %c0_18 = arith.constant 0 : index
      %c0_19 = arith.constant 0 : index
      %34 = vector.load %arg4[%c0_17, %c0_18, %c0_19] : memref<1x4x3xf32, #tpu.memory_space<vmem>>, vector<1x4x3xf32>
      %35 = vector.shape_cast %34 : vector<1x4x3xf32> to vector<4x3xf32>
      %36 = vector.shape_cast %33 : vector<4x3xf32> to vector<1x4x3xf32>
      tpu.vector_store %arg4[%c0_17, %c0_18, %c0_19], %36 {strides = array<i32>} : memref<1x4x3xf32, #tpu.memory_space<vmem>>, vector<1x4x3xf32>,
    } else {
    }
    %c0 = arith.constant 0 : index
    %c0_1 = arith.constant 0 : index
    %c0_2 = arith.constant 0 : index
    %3 = vector.load %arg2[%c0, %c0_1, %c0_2] : memref<1x4x256xf32, #tpu.memory_space<vmem>>, vector<1x4x256xf32>
    %4 = vector.shape_cast %3 : vector<1x4x256xf32> to vector<4x256xf32>
    %c0_3 = arith.constant 0 : index
    %c0_4 = arith.constant 0 : index
    %c0_5 = arith.constant 0 : index
    %5 = vector.load %arg3[%c0_3, %c0_4, %c0_5] : memref<1x4x256xf32, #tpu.memory_space<vmem>>, vector<1x4x256xf32>
    %6 = vector.shape_cast %5 : vector<1x4x256xf32> to vector<4x256xf32>
    %cst = arith.constant dense<0xFF800000> : vector<256xf32>
    %7 = vector.multi_reduction <maximumf>, %4, %cst [0] : vector<4x256xf32> to vector<256xf32>
    %8 = vector.shape_cast %7 : vector<256xf32> to vector<1x256xf32>
    %9 = vector.broadcast %8 : vector<1x256xf32> to vector<4x256xf32>
    %10 = arith.subf %4, %9 : vector<4x256xf32>
    %11 = math.exp %10 : vector<4x256xf32>
    %cst_6 = arith.constant dense<0.000000e+00> : vector<256xf32>
    %12 = vector.multi_reduction <add>, %11, %cst_6 [0] : vector<4x256xf32> to vector<256xf32>
    %13 = vector.shape_cast %12 : vector<256xf32> to vector<1x256xf32>
    %14 = tpu.reciprocal %13 : vector<1x256xf32> -> vector<1x256xf32>
    %15 = vector.broadcast %14 : vector<1x256xf32> to vector<4x256xf32>
    %16 = arith.mulf %11, %15 : vector<4x256xf32>
    %17 = arith.mulf %16, %6 : vector<4x256xf32>
    %cst_7 = arith.constant dense<0.000000e+00> : vector<4xf32>
    %18 = vector.multi_reduction <add>, %17, %cst_7 [1] : vector<4x256xf32> to vector<4xf32>
    %19 = vector.shape_cast %18 : vector<4xf32> to vector<4x1xf32>
    %20 = arith.mulf %16, %16 : vector<4x256xf32>
    %cst_8 = arith.constant dense<0.000000e+00> : vector<4xf32>
    %21 = vector.multi_reduction <add>, %20, %cst_8 [1] : vector<4x256xf32> to vector<4xf32>
    %22 = vector.shape_cast %21 : vector<4xf32> to vector<4x1xf32>
    %23 = arith.mulf %6, %6 : vector<4x256xf32>
    %cst_9 = arith.constant dense<0.000000e+00> : vector<4xf32>
    %24 = vector.multi_reduction <add>, %23, %cst_9 [1] : vector<4x256xf32> to vector<4xf32>
    %25 = vector.shape_cast %24 : vector<4xf32> to vector<4x1xf32>
    %c0_10 = arith.constant 0 : index
    %c0_11 = arith.constant 0 : index
    %c0_12 = arith.constant 0 : index
    %26 = vector.load %arg4[%c0_10, %c0_11, %c0_12] : memref<1x4x3xf32, #tpu.memory_space<vmem>>, vector<1x4x3xf32>
    %27 = vector.shape_cast %26 : vector<1x4x3xf32> to vector<4x3xf32>
    %28 = tpu.concatenate %19, %22, %25 in 1 : vector<4x1xf32>, vector<4x1xf32>, vector<4x1xf32> -> vector<4x3xf32>
    %29 = arith.addf %27, %28 : vector<4x3xf32>
    %c0_13 = arith.constant 0 : index
    %c0_14 = arith.constant 0 : index
    %c0_15 = arith.constant 0 : index
    %30 = vector.load %arg4[%c0_13, %c0_14, %c0_15] : memref<1x4x3xf32, #tpu.memory_space<vmem>>, vector<1x4x3xf32>
    %31 = vector.shape_cast %30 : vector<1x4x3xf32> to vector<4x3xf32>
    %32 = vector.shape_cast %29 : vector<4x3xf32> to vector<1x4x3xf32>
    tpu.vector_store %arg4[%c0_13, %c0_14, %c0_15], %32 {strides = array<i32>} : memref<1x4x3xf32, #tpu.memory_space<vmem>>, vector<1x4x3xf32>,
    return
  }
  func.func @transform_0(%arg0: i32, %arg1: i32) -> (i32, i32, i32) {
    %c0_i32 = arith.constant 0 : i32
    %c0_i32_0 = arith.constant 0 : i32
    return %arg0, %c0_i32, %arg1 : i32, i32, i32
  }
  func.func @transform_1(%arg0: i32, %arg1: i32) -> (i32, i32, i32) {
    %c0_i32 = arith.constant 0 : i32
    %c0_i32_0 = arith.constant 0 : i32
    return %arg0, %c0_i32, %arg1 : i32, i32, i32
  }
  func.func @transform_2(%arg0: i32, %arg1: i32) -> (i32, i32, i32) {
    %c0_i32 = arith.constant 0 : i32
    %c0_i32_0 = arith.constant 0 : i32
    %c0_i32_1 = arith.constant 0 : i32
    return %arg0, %c0_i32, %c0_i32_0 : i32, i32, i32
  }
}

</mosaic_0001>

<llo_original>
// kernel: dice_loss.1
$region0: #{dice_loss.1}
  #allocation0 [shape = 'u32[]', space=smem, size = 0x4, offset = 0x4, fixed_abs, tag = 'smem constant byte address 0x4 - core index']
  #allocation1 [shape = 'u32[144,128]{1,0:T(1,128)}', space=vmem, size = 0x12000, scoped, tag = 'internal scratch']
  %s0 = inlined_call_operand.vmem [shape: f32[2,4,256], index: 0, kind: input, shape index: {}]
  %s1 = inlined_call_operand.vmem [shape: f32[2,4,256], index: 1, kind: input, shape index: {}]
  %s2 = inlined_call_operand.vmem [shape: f32[2,4,3], index: 2, kind: output, shape index: {}]
  %s3 = sld [smem:[#allocation0]]
  $region45: #{dice_loss.1} parent=0
    _
  %s5 = ssub.s32 1, %s3
  %s6 = scalar_select 0, %s5, %s3
  loop: start=0, step=1, limit=4
  $region2: #{dice_loss.1} parent=0 // loop_pre_header
    _
  $region3: #{dice_loss.1} parent=0 // loop_header
    %s8 = sphi 0, %s12
    %p9 = scmp.ge.s32.totalorder %s8, 4
    %s15 = sphi 0, %s27
    %s16 = sphi 0, %s23
    %s17 = sphi 0, %s15
    %s18 = sphi 0, %s16
    %s19 = sphi 0, %s17
    %s20 = sphi 0, %s18
    %s32 = sphi 0, %s34
    %s35 = sphi 0, %s32
    %s36 = sphi 0, %s35
    %s52 = sphi 0, %s36
    %s60 = sphi 0, %s62
    %s63 = sphi 0, %s60
    %s64 = sphi 0, %s63
    %s80 = sphi 0, %s64
    %s86 = sphi 0, %s88
    %s89 = sphi 0, %s86
    %s90 = sphi 0, %s89
    %s106 = sphi 0, %s90
  $region4: #{dice_loss.1} parent=0 // loop_header_branch
    %11 = sbr.rel (%p9) target = $region8
  $region5: #{dice_loss.1} parent=0 // loop_body
    %s13 = ssub.s32 %s8, 1
    %s14 = ssub.s32 %s8, 2
    %s21 = sadd.s32 1, %s16
    %p22 = scmp.ge.s32.totalorder %s21, 1
    %s23 = scalar_select %p22, 0, %s21
    %s24 = sadd.s32 1, %s15
    %s25 = scalar_select %p22, %s24, %s15
    %p26 = scmp.ge.s32.totalorder %s25, 2
    %s27 = scalar_select %p26, 0, %s25
    %s28 = ssub.s32 %s15, %s27
    %s29 = ssub.s32 %s16, %s23
    %s30 = sor.u32 %s28, %s29
    %p31 = scmp.eq.s32.totalorder %s30, 0
    %s33 = sadd.s32 %s32, 1
    %s34 = scalar_select %p31, %s32, %s33
    %p37 = pneg %p31
    %p38 = scmp.eq.s32.totalorder %s8, 1
    %p39 = por %p37, %p38
    %p40 = scmp.ne.s32.totalorder %s32, %s35
    %p41 = scmp.eq.s32.totalorder %s8, 0
    %p42 = por %p40, %p41
    %p43 = scmp.ne.s32.totalorder %s32, %s35
    %p44 = scmp.eq.s32.totalorder %s13, 1
    %p45 = por %p43, %p44
    %p46 = scmp.ne.s32.totalorder %s35, %s36
    %p47 = scmp.eq.s32.totalorder %s13, 0
    %p48 = por %p46, %p47
    %p49 = scmp.ne.s32.totalorder %s35, %s36
    %p50 = scmp.eq.s32.totalorder %s14, 1
    %p51 = por %p49, %p50
    %p53 = scmp.ne.s32.totalorder %s36, %s52
    %p54 = scmp.eq.s32.totalorder %s14, 0
    %p55 = por %p53, %p54
    %s56 = ssub.s32 %s15, %s27
    %s57 = ssub.s32 %s16, %s23
    %s58 = sor.u32 %s56, %s57
    %p59 = scmp.eq.s32.totalorder %s58, 0
    %s61 = sadd.s32 %s60, 1
    %s62 = scalar_select %p59, %s60, %s61
    %p65 = pneg %p59
    %p66 = scmp.eq.s32.totalorder %s8, 1
    %p67 = por %p65, %p66
    %p68 = scmp.ne.s32.totalorder %s60, %s63
    %p69 = scmp.eq.s32.totalorder %s8, 0
    %p70 = por %p68, %p69
    %p71 = scmp.ne.s32.totalorder %s60, %s63
    %p72 = scmp.eq.s32.totalorder %s13, 1
    %p73 = por %p71, %p72
    %p74 = scmp.ne.s32.totalorder %s63, %s64
    %p75 = scmp.eq.s32.totalorder %s13, 0
    %p76 = por %p74, %p75
    %p77 = scmp.ne.s32.totalorder %s63, %s64
    %p78 = scmp.eq.s32.totalorder %s14, 1
    %p79 = por %p77, %p78
    %p81 = scmp.ne.s32.totalorder %s64, %s80
    %p82 = scmp.eq.s32.totalorder %s14, 0
    %p83 = por %p81, %p82
    %s84 = ssub.s32 %s15, %s27
    %p85 = scmp.eq.s32.totalorder %s84, 0
    %s87 = sadd.s32 %s86, 1
    %s88 = scalar_select %p85, %s86, %s87
    %p91 = pneg %p85
    %p92 = scmp.eq.s32.totalorder %s8, 1
    %p93 = por %p91, %p92
    %p94 = scmp.ne.s32.totalorder %s86, %s89
    %p95 = scmp.eq.s32.totalorder %s8, 0
    %p96 = por %p94, %p95
    %p97 = scmp.ne.s32.totalorder %s86, %s89
    %p98 = scmp.eq.s32.totalorder %s13, 1
    %p99 = por %p97, %p98
    %p100 = scmp.ne.s32.totalorder %s89, %s90
    %p101 = scmp.eq.s32.totalorder %s13, 0
    %p102 = por %p100, %p101
    %p103 = scmp.ne.s32.totalorder %s89, %s90
    %p104 = scmp.eq.s32.totalorder %s14, 1
    %p105 = por %p103, %p104
    %p107 = scmp.ne.s32.totalorder %s90, %s106
    %p108 = scmp.eq.s32.totalorder %s14, 0
    %p109 = por %p107, %p108
    %p110 = scmp.le.s32.totalorder 1, %s8
    %p111 = scmp.lt.s32.totalorder %s8, 3
    %p112 = pnand %p110, %p111
    %p113 = pneg %p112
    // Predicated region
    $region9: #{dice_loss.1} parent=5 // pred_check
      _
    $region10: #{dice_loss.1} parent=5 // pred_check_branch
      %115 = sbr.rel (%p112) target = $region12
    $region11: #{dice_loss.1} parent=5 // pred_region
      %s116 = ssub.s32 %s8, 1
    $region12: #{dice_loss.1} parent=5 // pred_fallthru
      _
    %p117 = scmp.lt.s32.totalorder %s8, 2
    // Predicated region
    $region13: #{dice_loss.1} parent=5 // pred_check
      %p118 = pneg %p117
    $region14: #{dice_loss.1} parent=5 // pred_check_branch
      %120 = sbr.rel (%p118) target = $region16
    $region15: #{dice_loss.1} parent=5 // pred_region
      // Predicated region
      $region17: #{dice_loss.1} parent=15 // pred_check
        %p121 = pneg %p42
      $region18: #{dice_loss.1} parent=15 // pred_check_branch
        %123 = sbr.rel (%p121) target = $region20
      $region19: #{dice_loss.1} parent=15 // pred_region
        %s124 = smul.u32 2, %s16
        %p125 = scmp.lt.s32.totalorder %s15, 1
        %s126 = scalar_select %p125, %s15, 1
        %p127 = scmp.lt.s32.totalorder %s124, 1
        %s128 = scalar_select %p127, %s124, 1
        %s129 = smul.addr %s126, 2
        %s130 = sadd.s32 %s128, %s129
        %s131 = smul.addr %s130, 4
        %s132 = scalar_lea.vmem %s0, %s131
        %s133 = smul.u32 2, %s16
      $region20: #{dice_loss.1} parent=15 // pred_fallthru
        _
      // Predicated region
      $region21: #{dice_loss.1} parent=15 // pred_check
        %p134 = pneg %p70
      $region22: #{dice_loss.1} parent=15 // pred_check_branch
        %136 = sbr.rel (%p134) target = $region24
      $region23: #{dice_loss.1} parent=15 // pred_region
        %s137 = smul.u32 2, %s16
        %p138 = scmp.lt.s32.totalorder %s15, 1
        %s139 = scalar_select %p138, %s15, 1
        %p140 = scmp.lt.s32.totalorder %s137, 1
        %s141 = scalar_select %p140, %s137, 1
        %s142 = smul.addr %s139, 2
        %s143 = sadd.s32 %s141, %s142
        %s144 = smul.addr %s143, 4
        %s145 = scalar_lea.vmem %s1, %s144
        %s146 = smul.u32 2, %s16
      $region24: #{dice_loss.1} parent=15 // pred_fallthru
        _
    $region16: #{dice_loss.1} parent=5 // pred_fallthru
      _
    %p147 = scmp.le.s32.totalorder 1, %s8
    %p148 = scmp.lt.s32.totalorder %s8, 3
    %p149 = pnand %p147, %p148
    %p150 = pneg %p149
    // Predicated region
    $region25: #{dice_loss.1} parent=5 // pred_check
      _
    $region26: #{dice_loss.1} parent=5 // pred_check_branch
      %152 = sbr.rel (%p149) target = $region28
    $region27: #{dice_loss.1} parent=5 // pred_region
      %s153 = ssub.s32 %s8, 1
      %s154 = smul.u32 2, %s18
      %p155 = scmp.lt.s32.totalorder %s17, 1
      %s156 = scalar_select %p155, %s17, 1
      %p157 = scmp.lt.s32.totalorder %s154, 1
      %s158 = scalar_select %p157, %s154, 1
      %s159 = smul.addr %s156, 2
      %s160 = sadd.s32 %s158, %s159
      %s161 = smul.addr %s160, 4
      %s162 = scalar_lea.vmem %s0, %s161
      %p163 = pneg %p48
      %p164 = pneg %p45
      %s165 = smul.u32 2, %s18
      %p166 = scmp.lt.s32.totalorder %s17, 1
      %s167 = scalar_select %p166, %s17, 1
      %p168 = scmp.lt.s32.totalorder %s165, 1
      %s169 = scalar_select %p168, %s165, 1
      %s170 = smul.addr %s167, 2
      %s171 = sadd.s32 %s169, %s170
      %s172 = smul.addr %s171, 4
      %s173 = scalar_lea.vmem %s1, %s172
      %p174 = pneg %p76
      %p175 = pneg %p73
      %p176 = pneg %p102
      %p177 = pneg %p99
      %p178 = scmp.lt.s32.totalorder %s17, 1
      %s179 = scalar_select %p178, %s17, 1
      %s180 = smul.addr %s179, 4
      %s181 = scalar_lea.vmem %s2, %s180
      %s182 = smul.u32 2, %s18
      %p183 = scmp.lt.s32.totalorder %s17, 1
      %s184 = scalar_select %p183, %s17, 1
      %p185 = scmp.lt.s32.totalorder %s182, 1
      %s186 = scalar_select %p185, %s182, 1
      %s187 = smul.addr %s184, 2
      %s188 = sadd.s32 %s186, %s187
      %s189 = smul.addr %s188, 4
      %s190 = scalar_lea.vmem %s0, %s189
      %s191 = smul.u32 2, %s18
      %s192 = smul.u32 2, %s18
      %p193 = scmp.lt.s32.totalorder %s17, 1
      %s194 = scalar_select %p193, %s17, 1
      %p195 = scmp.lt.s32.totalorder %s192, 1
      %s196 = scalar_select %p195, %s192, 1
      %s197 = smul.addr %s194, 2
      %s198 = sadd.s32 %s196, %s197
      %s199 = smul.addr %s198, 4
      %s200 = scalar_lea.vmem %s1, %s199
      %s201 = smul.u32 2, %s18
      %p202 = scmp.lt.s32.totalorder %s17, 1
      %s203 = scalar_select %p202, %s17, 1
      %s204 = smul.addr %s203, 4
      %s205 = scalar_lea.vmem %s2, %s204
      %p206 = scmp.eq.s32.totalorder %s18, 0
      // Predicated region
      $region29: #{dice_loss.1} parent=27 // pred_check
        %p207 = pneg %p206
      $region30: #{dice_loss.1} parent=27 // pred_check_branch
        %209 = sbr.rel (%p207) target = $region32
      $region31: #{dice_loss.1} parent=27 // pred_region
        %vm210 = vcmask 19456
        %211 = vst.msk [vmem:[%s205] sm:$0xf] %vm210, 0.0
      $region32: #{dice_loss.1} parent=27 // pred_fallthru
        _
      %v212 = vld [vmem:[%s190] sm:$0xff]
      %v213 = vld [vmem:[%s200] sm:$0xff]
      %v215 = vcombine.high %v212, %v212
      %vm217 = vcmask 1043456
      %v218 = vsel %vm217, %v212, -inf
      %v219 = vrot.slane %v218, 4
      %v220 = vmax.f32 %v218, %v219
      %v221 = vrot.slane %v220, 2
      %v222 = vmax.f32 %v220, %v221
      %v223 = vrot.slane %v222, 1
      %v224 = vmax.f32 %v222, %v223
      %v225 = vsel %vm217, %v215, -inf
      %v226 = vrot.slane %v225, 4
      %v227 = vmax.f32 %v225, %v226
      %v228 = vrot.slane %v227, 2
      %v229 = vmax.f32 %v227, %v228
      %v230 = vrot.slane %v229, 1
      %v231 = vmax.f32 %v229, %v230
      %v234 = vcombine.low %v224, %v231
      %v236 = vsub.f32 %v212, %v234
      %v237 = vmul.f32 %v236, 1.442695
      %v238 = vpow.pop %v237
      %v240 = vcombine.high %v238, %v238
      %v242 = vsel %vm217, %v238, 0.0
      %v243 = vrot.slane %v242, 4
      %v244 = vadd.f32 %v242, %v243
      %v245 = vrot.slane %v244, 2
      %v246 = vadd.f32 %v244, %v245
      %v247 = vrot.slane %v246, 1
      %v248 = vadd.f32 %v246, %v247
      %v249 = vsel %vm217, %v240, 0.0
      %v250 = vrot.slane %v249, 4
      %v251 = vadd.f32 %v249, %v250
      %v252 = vrot.slane %v251, 2
      %v253 = vadd.f32 %v251, %v252
      %v254 = vrot.slane %v253, 1
      %v255 = vadd.f32 %v253, %v254
      %v256 = vrcp.pop %v248
      %v257 = vrcp.pop %v255
      %v260 = vcombine.low %v256, %v257
      %v262 = vmul.f32 %v238, %v260
      %v263 = vmul.f32 %v262, %v213
      %v265 = vcombine.high %v263, %v263
      %v267 = vsel %vm217, %v263, 0.0
      %v268 = vsel %vm217, %v265, 0.0
      %v269 = vadd.f32 %v267, %v268
      %270 = vadd.xlane.f32.xlu0 %v269
      %v271 = vpop.xlane.xlu0 %270
      %v272 = vmul.f32 %v262, %v262
      %v274 = vcombine.high %v272, %v272
      %v276 = vsel %vm217, %v272, 0.0
      %v277 = vsel %vm217, %v274, 0.0
      %v278 = vadd.f32 %v276, %v277
      %279 = vadd.xlane.f32.xlu0 %v278
      %v280 = vpop.xlane.xlu0 %279
      %v281 = vmul.f32 %v213, %v213
      %v283 = vcombine.high %v281, %v281
      %v285 = vsel %vm217, %v281, 0.0
      %v286 = vsel %vm217, %v283, 0.0
      %v287 = vadd.f32 %v285, %v286
      %288 = vadd.xlane.f32.xlu0 %v287
      %v289 = vpop.xlane.xlu0 %288
      %v290 = vld [vmem:[%s205] sm:$0xf]
      %vm291 = vcmask 7168
      %v292 = vsel %vm291, %v271, %v280
      %vm293 = vcmask 15360
      %v294 = vsel %vm293, %v292, %v289
      %v295 = vadd.f32 %v290, %v294
      %vm296 = vcmask 19456
      %297 = vst.msk [vmem:[%s205] sm:$0xf] %vm296, %v295
      %p298 = scmp.lt.s32.totalorder %s17, 1
      %s299 = scalar_select %p298, %s17, 1
      %s300 = smul.addr %s299, 4
      %s301 = scalar_lea.vmem %s2, %s300
      // Predicated region
      $region33: #{dice_loss.1} parent=27 // pred_check
        %p302 = pneg %p99
      $region34: #{dice_loss.1} parent=27 // pred_check_branch
        %304 = sbr.rel (%p302) target = $region36
      $region35: #{dice_loss.1} parent=27 // pred_region
        _
      $region36: #{dice_loss.1} parent=27 // pred_fallthru
        _
    $region28: #{dice_loss.1} parent=5 // pred_fallthru
      _
    %p305 = scmp.le.s32.totalorder 2, %s8
    // Predicated region
    $region37: #{dice_loss.1} parent=5 // pred_check
      %p306 = pneg %p305
    $region38: #{dice_loss.1} parent=5 // pred_check_branch
      %308 = sbr.rel (%p306) target = $region40
    $region39: #{dice_loss.1} parent=5 // pred_region
      %s309 = ssub.s32 %s8, 2
      // Predicated region
      $region41: #{dice_loss.1} parent=39 // pred_check
        %p310 = pneg %p105
      $region42: #{dice_loss.1} parent=39 // pred_check_branch
        %312 = sbr.rel (%p310) target = $region44
      $region43: #{dice_loss.1} parent=39 // pred_region
        %p313 = scmp.lt.s32.totalorder %s19, 1
        %s314 = scalar_select %p313, %s19, 1
        %s315 = smul.addr %s314, 4
        %s316 = scalar_lea.vmem %s2, %s315
      $region44: #{dice_loss.1} parent=39 // pred_fallthru
        _
    $region40: #{dice_loss.1} parent=5 // pred_fallthru
      _
  $region6: #{dice_loss.1} parent=0 // loop_footer
    %s12 = sadd.s32 1, %s8
  $region7: #{dice_loss.1} parent=0 // loop_footer_branch
    %7 = sbr.rel target = $region3
  $region8: #{dice_loss.1} parent=0 // loop_exit
    _

</llo_original>
